<compile_context>
chip_gen: v7x
topology: tpu7x:2x2x1
jax: 0.10.0
libtpu: 0.0.40
codegen_flags: <defaults>
</compile_context>

<pallas_src>
import functools

import jax
import jax.numpy as jnp
from jax.experimental import pallas as pl
from jax.experimental.pallas import tpu as pltpu

C_IN = 2
C1 = 32
C2 = 64
H1 = 50
H1P = 64          # Linear(64->50) padded to 64 rows (zeros)
K1 = 5            # conv1 kernel (padding=2)
K2 = 3            # conv2 kernel (padding=1)
LANE = 128
_NL_CAP = 8192    # max lanes (TB * Lpad) per grid step -> ~8-10 MiB live VMEM


def _shift_lanes(x, d):
    """out[:, j] = x[:, j - d], zero filled at the edges (static lane shift)."""
    if d == 0:
        return x
    n = x.shape[-1]
    zeros = jnp.zeros((x.shape[0], abs(d)), x.dtype)
    if d > 0:
        return jnp.concatenate([zeros, x[:, : n - d]], axis=-1)
    return jnp.concatenate([x[:, -d:], zeros], axis=-1)


def _kalshi_kernel(inv_len,
                   x_ref,      # (C_IN, NL)   bf16, NL = TB * Lpad (L on lanes)
                   mask_ref,   # (1, NL)      f32, 1.0 on valid positions (l < L)
                   sel_ref,    # (NL, TBP)    bf16 0/1 pooling selector
                   w1_ref,     # (C1, K1*C_IN)   bf16
                   b1_ref,     # (C1, 1)         f32
                   w2_ref,     # (C2, K2*C1)     bf16
                   b2_ref,     # (C2, 1)         f32
                   fw1_ref,    # (H1P, C2)       bf16
                   fb1_ref,    # (H1P, 1)        f32
                   fw2_ref,    # (H1P, 1)        f32
                   fb2_ref,    # (1, 1)          f32
                   out_ref):   # (1, 1, TBP)     f32
    x = x_ref[...]                                              # (2, NL) bf16

    # ---- Conv1d(2->32, k=5, pad=2): one im2col matmul, taps via lane shifts.
    # Inter-sample leakage of the shifts is impossible because Lpad >= L + 2
    # and positions l >= L of every sample are zero.
    rhs1 = jnp.concatenate([_shift_lanes(x, 2 - k) for k in range(K1)], axis=0)
    h1 = jnp.dot(w1_ref[...], rhs1, preferred_element_type=jnp.float32)
    h1 = jnp.maximum(h1 + b1_ref[...], 0.0) * mask_ref[...]     # zero padded tail
    h1 = h1.astype(jnp.bfloat16)                                # (32, NL)

    # ---- Conv1d(32->64, k=3, pad=1): one im2col matmul (K = 96).
    rhs2 = jnp.concatenate([_shift_lanes(h1, 1 - k) for k in range(K2)], axis=0)
    h2 = jnp.dot(w2_ref[...], rhs2, preferred_element_type=jnp.float32)
    h2 = jnp.maximum(h2 + b2_ref[...], 0.0)                     # (64, NL) f32

    # ---- AdaptiveAvgPool1d(1): per-sample segmented mean via selector matmul.
    pooled = jnp.dot(h2.astype(jnp.bfloat16), sel_ref[...],
                     preferred_element_type=jnp.float32) * inv_len   # (64, TBP)

    # ---- Linear(64->50) + ReLU (padded to 64 rows; pad rows stay zero).
    z1 = jnp.dot(fw1_ref[...], pooled.astype(jnp.bfloat16),
                 preferred_element_type=jnp.float32)
    z1 = jnp.maximum(z1 + fb1_ref[...], 0.0)                    # (64, TBP)

    # ---- Linear(50->1): sublane reduce -> lane-oriented (1, TBP) row.
    out_row = jnp.sum(z1 * fw2_ref[...], axis=0, keepdims=True) + fb2_ref[...]
    out_ref[...] = out_row.reshape(1, 1, -1).astype(out_ref.dtype)


@jax.jit
def kalshi_cnn_forward(x_ncw, params):
    """x_ncw: (B, 2, seq_len) float32 (PyTorch NCW). Returns (B, 1) float32."""
    w1, b1, w2, b2, fw1, fb1, fw2, fb2 = params
    B, cin, L = x_ncw.shape
    assert cin == C_IN

    # --- static tiling decisions (shapes are static under jit) ---
    # Lpad >= L + 2 (and a multiple of 128) so conv taps never cross samples.
    Lpad = ((L + 2 + LANE - 1) // LANE) * LANE
    tb = max(1, min(_NL_CAP // Lpad, B))        # VMEM-derived samples per tile
    if B > 8:
        tb = min(tb, -(-B // 2))                # >= 2 grid steps (v7x megacore)
    # TODO(synk): for very long seq_len (Lpad > _NL_CAP) add an inner L-tile grid
    #             axis with a pooled-sum VMEM accumulator instead of tb == 1.
    b_pad = -(-B // tb) * tb
    grid = b_pad // tb
    nl = tb * Lpad
    tbp = -(-tb // 8) * 8                       # FC / output lane width >= 8

    # --- glue: NCW -> (C, Bpad*Lpad) lane-dense layout, bf16 MXU inputs ---
    xl = jnp.pad(x_ncw.astype(jnp.float32),
                 ((0, b_pad - B), (0, 0), (0, Lpad - L)))        # (Bpad, 2, Lpad)
    x_flat = (jnp.transpose(xl, (1, 0, 2))
              .reshape(C_IN, b_pad * Lpad).astype(jnp.bfloat16))

    valid = (jnp.arange(Lpad) < L).astype(jnp.float32)           # (Lpad,)
    mask_row = jnp.tile(valid, (tb,)).reshape(1, nl)             # (1, NL) f32
    eye = jnp.eye(tb, tbp, dtype=jnp.float32)                    # (tb, tbp)
    sel = (eye[:, None, :] * valid[None, :, None]).reshape(nl, tbp).astype(jnp.bfloat16)

    # im2col-stacked conv weights (weights as matmul LHS), FC head padded.
    w1_lhs = jnp.transpose(w1, (0, 2, 1)).reshape(C1, K1 * C_IN).astype(jnp.bfloat16)
    w2_lhs = jnp.transpose(w2, (0, 2, 1)).reshape(C2, K2 * C1).astype(jnp.bfloat16)
    b1_col = b1.reshape(C1, 1).astype(jnp.float32)
    b2_col = b2.reshape(C2, 1).astype(jnp.float32)
    fw1_lhs = jnp.pad(fw1.astype(jnp.float32),
                      ((0, H1P - H1), (0, 0))).astype(jnp.bfloat16)  # (64, 64)
    fb1_col = jnp.pad(fb1.reshape(H1, 1).astype(jnp.float32), ((0, H1P - H1), (0, 0)))
    fw2_col = jnp.pad(fw2.reshape(H1, 1).astype(jnp.float32), ((0, H1P - H1), (0, 0)))
    fb2_s = fb2.reshape(1, 1).astype(jnp.float32)

    const2 = lambda i: (0, 0)
    kernel = functools.partial(_kalshi_kernel, float(1.0 / L))

    out = pl.pallas_call(
        kernel,
        out_shape=jax.ShapeDtypeStruct((grid, 1, tbp), jnp.float32),
        grid=(grid,),
        in_specs=[
            pl.BlockSpec((C_IN, nl), lambda i: (0, i)),   # batch-tiled, lane-dense input
            pl.BlockSpec((1, nl), const2),                # valid-length mask (tile const)
            pl.BlockSpec((nl, tbp), const2),              # pooling selector  (tile const)
            pl.BlockSpec((C1, K1 * C_IN), const2),        # weights: DMA'd once
            pl.BlockSpec((C1, 1), const2),
            pl.BlockSpec((C2, K2 * C1), const2),
            pl.BlockSpec((C2, 1), const2),
            pl.BlockSpec((H1P, C2), const2),
            pl.BlockSpec((H1P, 1), const2),
            pl.BlockSpec((H1P, 1), const2),
            pl.BlockSpec((1, 1), const2),
        ],
        out_specs=pl.BlockSpec((1, 1, tbp), lambda i: (i, 0, 0)),
        compiler_params=pltpu.CompilerParams(
            dimension_semantics=("parallel",),
            vmem_limit_bytes=32 * 1024 * 1024,
        ),
    )(x_flat, mask_row, sel, w1_lhs, b1_col, w2_lhs, b2_col,
      fw1_lhs, fb1_col, fw2_col, fb2_s)

    y = out[:, 0, :tb].reshape(b_pad)[:B].reshape(B, 1)
    return y


def init_params(key):
    """Deterministic synthetic parameters, PyTorch layouts:
       conv weight (C_out, C_in, K), linear weight (out, in)."""
    ks = jax.random.split(key, 8)
    w1 = jax.random.normal(ks[0], (C1, C_IN, K1), jnp.float32) * 0.1
    b1 = jax.random.normal(ks[1], (C1,), jnp.float32) * 0.01
    w2 = jax.random.normal(ks[2], (C2, C1, K2), jnp.float32) * 0.05
    b2 = jax.random.normal(ks[3], (C2,), jnp.float32) * 0.01
    fw1 = jax.random.normal(ks[4], (H1, C2), jnp.float32) * 0.1
    fb1 = jax.random.normal(ks[5], (H1,), jnp.float32) * 0.01
    fw2 = jax.random.normal(ks[6], (1, H1), jnp.float32) * 0.1
    fb2 = jax.random.normal(ks[7], (1,), jnp.float32) * 0.01
    return (w1, b1, w2, b2, fw1, fb1, fw2, fb2)


def reference_forward(x_ncw, params):
    """Pure-JAX f32 reference with PyTorch semantics (sanity check)."""
    w1, b1, w2, b2, fw1, fb1, fw2, fb2 = params
    x = x_ncw.astype(jnp.float32)
    _, _, L = x.shape
    xp = jnp.pad(x, ((0, 0), (0, 0), (2, 2)))
    h1 = sum(jnp.einsum('bcl,oc->bol', xp[:, :, k:k + L], w1[:, :, k]) for k in range(K1))
    h1 = jax.nn.relu(h1 + b1.reshape(1, C1, 1))
    h1p = jnp.pad(h1, ((0, 0), (0, 0), (1, 1)))
    h2 = sum(jnp.einsum('bcl,oc->bol', h1p[:, :, k:k + L], w2[:, :, k]) for k in range(K2))
    h2 = jax.nn.relu(h2 + b2.reshape(1, C2, 1))
    pooled = jnp.mean(h2, axis=-1)                # (B, 64)
    z1 = jax.nn.relu(pooled @ fw1.T + fb1)        # (B, 50)
    return z1 @ fw2.T + fb2                       # (B, 1)


if __name__ == "__main__":
    key = jax.random.PRNGKey(0)
    k_x, k_p = jax.random.split(key)

    B, seq_len = 2, 16
    x = jax.random.normal(k_x, (B, C_IN, seq_len), jnp.float32)   # PyTorch NCW input
    params = init_params(k_p)

    y = jax.block_until_ready(kalshi_cnn_forward(x, params))
    y_ref = reference_forward(x, params)

    assert y.shape == (B, 1)
    # bf16 MXU inputs with f32 accumulation -> relaxed tolerance vs f32 reference.
    assert jnp.allclose(y, y_ref, atol=2e-2, rtol=2e-2), (y, y_ref)

    print("KERNEL_OK")
</pallas_src>

<mosaic_0001>
module attributes {stable_mosaic.version = 11 : i64} {
  func.func @_kalshi_kernel(%arg0: i32, %arg1: memref<2x256xbf16, #tpu.memory_space<vmem>>, %arg2: memref<1x256xf32, #tpu.memory_space<vmem>>, %arg3: memref<256x8xbf16, #tpu.memory_space<vmem>>, %arg4: memref<32x10xbf16, #tpu.memory_space<vmem>>, %arg5: memref<32x1xf32, #tpu.memory_space<vmem>>, %arg6: memref<64x96xbf16, #tpu.memory_space<vmem>>, %arg7: memref<64x1xf32, #tpu.memory_space<vmem>>, %arg8: memref<64x64xbf16, #tpu.memory_space<vmem>>, %arg9: memref<64x1xf32, #tpu.memory_space<vmem>>, %arg10: memref<64x1xf32, #tpu.memory_space<vmem>>, %arg11: memref<1x1xf32, #tpu.memory_space<vmem>>, %arg12: memref<1x1x8xf32, #tpu.memory_space<vmem>>) attributes {dimension_semantics = [#tpu.dimension_semantics<parallel>], iteration_bounds = array<i64: 1>, scalar_prefetch = 0 : i64, scratch_operands = 0 : i64, tpu.core_type = #tpu.core_type<tc>, window_params = [{transform_indices = @transform_0, window_bounds = array<i64: 2, 256>}, {pipeline_mode = #tpu.pipeline_mode<synchronous>, transform_indices = @transform_1, window_bounds = array<i64: 1, 256>}, {pipeline_mode = #tpu.pipeline_mode<synchronous>, transform_indices = @transform_2, window_bounds = array<i64: 256, 8>}, {pipeline_mode = #tpu.pipeline_mode<synchronous>, transform_indices = @transform_3, window_bounds = array<i64: 32, 10>}, {pipeline_mode = #tpu.pipeline_mode<synchronous>, transform_indices = @transform_4, window_bounds = array<i64: 32, 1>}, {pipeline_mode = #tpu.pipeline_mode<synchronous>, transform_indices = @transform_5, window_bounds = array<i64: 64, 96>}, {pipeline_mode = #tpu.pipeline_mode<synchronous>, transform_indices = @transform_6, window_bounds = array<i64: 64, 1>}, {pipeline_mode = #tpu.pipeline_mode<synchronous>, transform_indices = @transform_7, window_bounds = array<i64: 64, 64>}, {pipeline_mode = #tpu.pipeline_mode<synchronous>, transform_indices = @transform_8, window_bounds = array<i64: 64, 1>}, {pipeline_mode = #tpu.pipeline_mode<synchronous>, transform_indices = @transform_9, window_bounds = array<i64: 64, 1>}, {pipeline_mode = #tpu.pipeline_mode<synchronous>, transform_indices = @transform_10, window_bounds = array<i64: 1, 1>}, {transform_indices = @transform_11, window_bounds = array<i64: 1, 1, 8>}]} {
    %c0 = arith.constant 0 : index
    %c0_0 = arith.constant 0 : index
    %0 = vector.load %arg1[%c0, %c0_0] : memref<2x256xbf16, #tpu.memory_space<vmem>>, vector<2x256xbf16>
    %cst = arith.constant 0.000000e+00 : bf16
    %1 = vector.broadcast %cst : bf16 to vector<2x2xbf16>
    %2 = vector.extract_strided_slice %0 {offsets = [0, 0], sizes = [2, 254], strides = [1, 1]} : vector<2x256xbf16> to vector<2x254xbf16>
    %3 = tpu.concatenate %1, %2 in 1 : vector<2x2xbf16>, vector<2x254xbf16> -> vector<2x256xbf16>
    %cst_1 = arith.constant 0.000000e+00 : bf16
    %4 = vector.broadcast %cst_1 : bf16 to vector<2x1xbf16>
    %5 = vector.extract_strided_slice %0 {offsets = [0, 0], sizes = [2, 255], strides = [1, 1]} : vector<2x256xbf16> to vector<2x255xbf16>
    %6 = tpu.concatenate %4, %5 in 1 : vector<2x1xbf16>, vector<2x255xbf16> -> vector<2x256xbf16>
    %cst_2 = arith.constant 0.000000e+00 : bf16
    %7 = vector.broadcast %cst_2 : bf16 to vector<2x1xbf16>
    %8 = vector.extract_strided_slice %0 {offsets = [0, 1], sizes = [2, 255], strides = [1, 1]} : vector<2x256xbf16> to vector<2x255xbf16>
    %9 = tpu.concatenate %8, %7 in 1 : vector<2x255xbf16>, vector<2x1xbf16> -> vector<2x256xbf16>
    %cst_3 = arith.constant 0.000000e+00 : bf16
    %10 = vector.broadcast %cst_3 : bf16 to vector<2x2xbf16>
    %11 = vector.extract_strided_slice %0 {offsets = [0, 2], sizes = [2, 254], strides = [1, 1]} : vector<2x256xbf16> to vector<2x254xbf16>
    %12 = tpu.concatenate %11, %10 in 1 : vector<2x254xbf16>, vector<2x2xbf16> -> vector<2x256xbf16>
    %13 = tpu.concatenate %3, %6, %0, %9, %12 in 0 : vector<2x256xbf16>, vector<2x256xbf16>, vector<2x256xbf16>, vector<2x256xbf16>, vector<2x256xbf16> -> vector<10x256xbf16>
    %c0_4 = arith.constant 0 : index
    %c0_5 = arith.constant 0 : index
    %14 = vector.load %arg4[%c0_4, %c0_5] : memref<32x10xbf16, #tpu.memory_space<vmem>>, vector<32x10xbf16>
    %cst_6 = arith.constant dense<0.000000e+00> : vector<32x256xf32>
    %15 = tpu.matmul %14, %13, %cst_6 {dimension_numbers = #tpu.dot_dimension_numbers<[1], [0], [0], [1], [0, 0, 1, 1], [], []>} : vector<32x10xbf16>, vector<10x256xbf16>, vector<32x256xf32> -> vector<32x256xf32>
    %c0_7 = arith.constant 0 : index
    %c0_8 = arith.constant 0 : index
    %16 = vector.load %arg5[%c0_7, %c0_8] : memref<32x1xf32, #tpu.memory_space<vmem>>, vector<32x1xf32>
    %17 = vector.broadcast %16 : vector<32x1xf32> to vector<32x256xf32>
    %18 = arith.addf %15, %17 : vector<32x256xf32>
    %cst_9 = arith.constant 0.000000e+00 : f32
    %19 = vector.broadcast %cst_9 : f32 to vector<32x256xf32>
    %20 = arith.maximumf %18, %19 : vector<32x256xf32>
    %c0_10 = arith.constant 0 : index
    %c0_11 = arith.constant 0 : index
    %21 = vector.load %arg2[%c0_10, %c0_11] : memref<1x256xf32, #tpu.memory_space<vmem>>, vector<1x256xf32>
    %22 = vector.broadcast %21 : vector<1x256xf32> to vector<32x256xf32>
    %23 = arith.mulf %20, %22 : vector<32x256xf32>
    %24 = arith.truncf %23 : vector<32x256xf32> to vector<32x256xbf16>
    %cst_12 = arith.constant 0.000000e+00 : bf16
    %25 = vector.broadcast %cst_12 : bf16 to vector<32x1xbf16>
    %26 = vector.extract_strided_slice %24 {offsets = [0, 0], sizes = [32, 255], strides = [1, 1]} : vector<32x256xbf16> to vector<32x255xbf16>
    %27 = tpu.concatenate %25, %26 in 1 : vector<32x1xbf16>, vector<32x255xbf16> -> vector<32x256xbf16>
    %cst_13 = arith.constant 0.000000e+00 : bf16
    %28 = vector.broadcast %cst_13 : bf16 to vector<32x1xbf16>
    %29 = vector.extract_strided_slice %24 {offsets = [0, 1], sizes = [32, 255], strides = [1, 1]} : vector<32x256xbf16> to vector<32x255xbf16>
    %30 = tpu.concatenate %29, %28 in 1 : vector<32x255xbf16>, vector<32x1xbf16> -> vector<32x256xbf16>
    %31 = tpu.concatenate %27, %24, %30 in 0 : vector<32x256xbf16>, vector<32x256xbf16>, vector<32x256xbf16> -> vector<96x256xbf16>
    %c0_14 = arith.constant 0 : index
    %c0_15 = arith.constant 0 : index
    %32 = vector.load %arg6[%c0_14, %c0_15] : memref<64x96xbf16, #tpu.memory_space<vmem>>, vector<64x96xbf16>
    %cst_16 = arith.constant dense<0.000000e+00> : vector<64x256xf32>
    %33 = tpu.matmul %32, %31, %cst_16 {dimension_numbers = #tpu.dot_dimension_numbers<[1], [0], [0], [1], [0, 0, 1, 1], [], []>} : vector<64x96xbf16>, vector<96x256xbf16>, vector<64x256xf32> -> vector<64x256xf32>
    %c0_17 = arith.constant 0 : index
    %c0_18 = arith.constant 0 : index
    %34 = vector.load %arg7[%c0_17, %c0_18] : memref<64x1xf32, #tpu.memory_space<vmem>>, vector<64x1xf32>
    %35 = vector.broadcast %34 : vector<64x1xf32> to vector<64x256xf32>
    %36 = arith.addf %33, %35 : vector<64x256xf32>
    %cst_19 = arith.constant 0.000000e+00 : f32
    %37 = vector.broadcast %cst_19 : f32 to vector<64x256xf32>
    %38 = arith.maximumf %36, %37 : vector<64x256xf32>
    %39 = arith.truncf %38 : vector<64x256xf32> to vector<64x256xbf16>
    %c0_20 = arith.constant 0 : index
    %c0_21 = arith.constant 0 : index
    %40 = vector.load %arg3[%c0_20, %c0_21] : memref<256x8xbf16, #tpu.memory_space<vmem>>, vector<256x8xbf16>
    %cst_22 = arith.constant dense<0.000000e+00> : vector<64x8xf32>
    %41 = tpu.matmul %39, %40, %cst_22 {dimension_numbers = #tpu.dot_dimension_numbers<[1], [0], [0], [1], [0, 0, 1, 1], [], []>} : vector<64x256xbf16>, vector<256x8xbf16>, vector<64x8xf32> -> vector<64x8xf32>
    %cst_23 = arith.constant 6.250000e-02 : f32
    %42 = vector.broadcast %cst_23 : f32 to vector<64x8xf32>
    %43 = arith.mulf %41, %42 : vector<64x8xf32>
    %c0_24 = arith.constant 0 : index
    %c0_25 = arith.constant 0 : index
    %44 = vector.load %arg8[%c0_24, %c0_25] : memref<64x64xbf16, #tpu.memory_space<vmem>>, vector<64x64xbf16>
    %45 = arith.truncf %43 : vector<64x8xf32> to vector<64x8xbf16>
    %cst_26 = arith.constant dense<0.000000e+00> : vector<64x8xf32>
    %46 = tpu.matmul %44, %45, %cst_26 {dimension_numbers = #tpu.dot_dimension_numbers<[1], [0], [0], [1], [0, 0, 1, 1], [], []>} : vector<64x64xbf16>, vector<64x8xbf16>, vector<64x8xf32> -> vector<64x8xf32>
    %c0_27 = arith.constant 0 : index
    %c0_28 = arith.constant 0 : index
    %47 = vector.load %arg9[%c0_27, %c0_28] : memref<64x1xf32, #tpu.memory_space<vmem>>, vector<64x1xf32>
    %48 = vector.broadcast %47 : vector<64x1xf32> to vector<64x8xf32>
    %49 = arith.addf %46, %48 : vector<64x8xf32>
    %cst_29 = arith.constant 0.000000e+00 : f32
    %50 = vector.broadcast %cst_29 : f32 to vector<64x8xf32>
    %51 = arith.maximumf %49, %50 : vector<64x8xf32>
    %c0_30 = arith.constant 0 : index
    %c0_31 = arith.constant 0 : index
    %52 = vector.load %arg10[%c0_30, %c0_31] : memref<64x1xf32, #tpu.memory_space<vmem>>, vector<64x1xf32>
    %53 = vector.broadcast %52 : vector<64x1xf32> to vector<64x8xf32>
    %54 = arith.mulf %51, %53 : vector<64x8xf32>
    %cst_32 = arith.constant dense<0.000000e+00> : vector<8xf32>
    %55 = vector.multi_reduction <add>, %54, %cst_32 [0] : vector<64x8xf32> to vector<8xf32>
    %56 = vector.shape_cast %55 : vector<8xf32> to vector<1x8xf32>
    %c0_33 = arith.constant 0 : index
    %c0_34 = arith.constant 0 : index
    %57 = vector.load %arg11[%c0_33, %c0_34] : memref<1x1xf32, #tpu.memory_space<vmem>>, vector<1x1xf32>
    %58 = vector.broadcast %57 : vector<1x1xf32> to vector<1x8xf32>
    %59 = arith.addf %56, %58 : vector<1x8xf32>
    %60 = vector.shape_cast %59 : vector<1x8xf32> to vector<1x1x8xf32>
    %c0_35 = arith.constant 0 : index
    %c0_36 = arith.constant 0 : index
    %c0_37 = arith.constant 0 : index
    %61 = vector.load %arg12[%c0_35, %c0_36, %c0_37] : memref<1x1x8xf32, #tpu.memory_space<vmem>>, vector<1x1x8xf32>
    tpu.vector_store %arg12[%c0_35, %c0_36, %c0_37], %60 {strides = array<i32>} : memref<1x1x8xf32, #tpu.memory_space<vmem>>, vector<1x1x8xf32>,
    return
  }
  func.func @transform_0(%arg0: i32) -> (i32, i32) {
    %c0_i32 = arith.constant 0 : i32
    %c0_i32_0 = arith.constant 0 : i32
    return %c0_i32, %arg0 : i32, i32
  }
  func.func @transform_1(%arg0: i32) -> (i32, i32) {
    %c0_i32 = arith.constant 0 : i32
    %c0_i32_0 = arith.constant 0 : i32
    %c0_i32_1 = arith.constant 0 : i32
    return %c0_i32, %c0_i32_0 : i32, i32
  }
  func.func @transform_2(%arg0: i32) -> (i32, i32) {
    %c0_i32 = arith.constant 0 : i32
    %c0_i32_0 = arith.constant 0 : i32
    %c0_i32_1 = arith.constant 0 : i32
    return %c0_i32, %c0_i32_0 : i32, i32
  }
  func.func @transform_3(%arg0: i32) -> (i32, i32) {
    %c0_i32 = arith.constant 0 : i32
    %c0_i32_0 = arith.constant 0 : i32
    %c0_i32_1 = arith.constant 0 : i32
    return %c0_i32, %c0_i32_0 : i32, i32
  }
  func.func @transform_4(%arg0: i32) -> (i32, i32) {
    %c0_i32 = arith.constant 0 : i32
    %c0_i32_0 = arith.constant 0 : i32
    %c0_i32_1 = arith.constant 0 : i32
    return %c0_i32, %c0_i32_0 : i32, i32
  }
  func.func @transform_5(%arg0: i32) -> (i32, i32) {
    %c0_i32 = arith.constant 0 : i32
    %c0_i32_0 = arith.constant 0 : i32
    %c0_i32_1 = arith.constant 0 : i32
    return %c0_i32, %c0_i32_0 : i32, i32
  }
  func.func @transform_6(%arg0: i32) -> (i32, i32) {
    %c0_i32 = arith.constant 0 : i32
    %c0_i32_0 = arith.constant 0 : i32
    %c0_i32_1 = arith.constant 0 : i32
    return %c0_i32, %c0_i32_0 : i32, i32
  }
  func.func @transform_7(%arg0: i32) -> (i32, i32) {
    %c0_i32 = arith.constant 0 : i32
    %c0_i32_0 = arith.constant 0 : i32
    %c0_i32_1 = arith.constant 0 : i32
    return %c0_i32, %c0_i32_0 : i32, i32
  }
  func.func @transform_8(%arg0: i32) -> (i32, i32) {
    %c0_i32 = arith.constant 0 : i32
    %c0_i32_0 = arith.constant 0 : i32
    %c0_i32_1 = arith.constant 0 : i32
    return %c0_i32, %c0_i32_0 : i32, i32
  }
  func.func @transform_9(%arg0: i32) -> (i32, i32) {
    %c0_i32 = arith.constant 0 : i32
    %c0_i32_0 = arith.constant 0 : i32
    %c0_i32_1 = arith.constant 0 : i32
    return %c0_i32, %c0_i32_0 : i32, i32
  }
  func.func @transform_10(%arg0: i32) -> (i32, i32) {
    %c0_i32 = arith.constant 0 : i32
    %c0_i32_0 = arith.constant 0 : i32
    %c0_i32_1 = arith.constant 0 : i32
    return %c0_i32, %c0_i32_0 : i32, i32
  }
  func.func @transform_11(%arg0: i32) -> (i32, i32, i32) {
    %c0_i32 = arith.constant 0 : i32
    %c0_i32_0 = arith.constant 0 : i32
    %c0_i32_1 = arith.constant 0 : i32
    return %arg0, %c0_i32, %c0_i32_0 : i32, i32, i32
  }
}

</mosaic_0001>

<llo_original>
// kernel: tile.8
$region0: #{tile.8}
  #allocation0 [shape = 's32[1]{0}', space=sflag, size = 0x4, scoped, tag = 'scoped memory for tile.8']
  %s0 = inlined_call_operand.vmem [shape: f32[128], index: 0, kind: input, shape index: {}]
  %s1 = inlined_call_operand.vmem [shape: f32[2,128], index: 1, kind: output, shape index: {}]
  // Predicated region
  $region2: #{tile.8} parent=0 // pred_check
    _
  $region3: #{tile.8} parent=0 // pred_check_branch
    %3 = sbr.rel (0) target = $region5
  $region4: #{tile.8} parent=0 // pred_region
    _
  $region5: #{tile.8} parent=0 // pred_fallthru
    _
  %v4 = vld [vmem:[%s0] ss:$0 sm:$0xff]
  %5 = vst [vmem:[%s1] sm:$0x3] %v4

// kernel: kalshi_cnn_forward.1
$region0: #{kalshi_cnn_forward.1}
  #allocation0 [shape = 'u32[]', space=smem, size = 0x4, offset = 0x4, fixed_abs, tag = 'smem constant byte address 0x4 - core index']
  #allocation1 [shape = 'u32[144,128]{1,0:T(1,128)}', space=vmem, size = 0x12000, scoped, tag = 'internal scratch']
  #allocation2 [shape = 'f32[1,1]{1,0:T(1,128)S(1)}', space=vmem, size = 0x200, scoped, tag = 'scoped memory for kalshi_cnn_forward.1']
  %s0 = inlined_call_operand.vmem [shape: bf16[2,256], index: 0, kind: input, shape index: {}]
  %s1 = inlined_call_operand.vmem [shape: f32[1,256], index: 1, kind: input, shape index: {}]
  %s2 = inlined_call_operand.vmem [shape: bf16[256,8], index: 2, kind: input, shape index: {}]
  %s3 = inlined_call_operand.vmem [shape: bf16[32,10], index: 3, kind: input, shape index: {}]
  %s4 = inlined_call_operand.vmem [shape: f32[32,1], index: 4, kind: input, shape index: {}]
  %s5 = inlined_call_operand.vmem [shape: bf16[64,96], index: 5, kind: input, shape index: {}]
  %s6 = inlined_call_operand.vmem [shape: f32[64,1], index: 6, kind: input, shape index: {}]
  %s7 = inlined_call_operand.vmem [shape: bf16[64,64], index: 7, kind: input, shape index: {}]
  %s8 = inlined_call_operand.vmem [shape: f32[64,1], index: 8, kind: input, shape index: {}]
  %s9 = inlined_call_operand.vmem [shape: f32[64,1], index: 9, kind: input, shape index: {}]
  %s10 = inlined_call_operand.<no memory space> [shape: f32[1,1], index: 10, kind: input, shape index: {}]
  %s11 = inlined_call_operand.vmem [shape: f32[1,1,8], index: 11, kind: output, shape index: {}]
  %s12 = sld [smem:[#allocation0]]
  $region54: #{kalshi_cnn_forward.1} parent=0
    _
  %s14 = ssub.s32 1, %s12
  %s15 = scalar_select 0, %s14, %s12
  %v16 = vstv %s10
  %17 = vst [vmem:[#allocation2] sm:$0x1] %v16
  // Predicated region
  $region2: #{kalshi_cnn_forward.1} parent=0 // pred_check
    _
  $region3: #{kalshi_cnn_forward.1} parent=0 // pred_check_branch
    %19 = sbr.rel (0) target = $region5
  $region4: #{kalshi_cnn_forward.1} parent=0 // pred_region
    _
  $region5: #{kalshi_cnn_forward.1} parent=0 // pred_fallthru
    _
  // Predicated region
  $region6: #{kalshi_cnn_forward.1} parent=0 // pred_check
    _
  $region7: #{kalshi_cnn_forward.1} parent=0 // pred_check_branch
    %21 = sbr.rel (0) target = $region9
  $region8: #{kalshi_cnn_forward.1} parent=0 // pred_region
    _
  $region9: #{kalshi_cnn_forward.1} parent=0 // pred_fallthru
    _
  // Predicated region
  $region10: #{kalshi_cnn_forward.1} parent=0 // pred_check
    _
  $region11: #{kalshi_cnn_forward.1} parent=0 // pred_check_branch
    %23 = sbr.rel (0) target = $region13
  $region12: #{kalshi_cnn_forward.1} parent=0 // pred_region
    _
  $region13: #{kalshi_cnn_forward.1} parent=0 // pred_fallthru
    _
  // Predicated region
  $region14: #{kalshi_cnn_forward.1} parent=0 // pred_check
    _
  $region15: #{kalshi_cnn_forward.1} parent=0 // pred_check_branch
    %25 = sbr.rel (0) target = $region17
  $region16: #{kalshi_cnn_forward.1} parent=0 // pred_region
    _
  $region17: #{kalshi_cnn_forward.1} parent=0 // pred_fallthru
    _
  // Predicated region
  $region18: #{kalshi_cnn_forward.1} parent=0 // pred_check
    _
  $region19: #{kalshi_cnn_forward.1} parent=0 // pred_check_branch
    %27 = sbr.rel (0) target = $region21
  $region20: #{kalshi_cnn_forward.1} parent=0 // pred_region
    _
  $region21: #{kalshi_cnn_forward.1} parent=0 // pred_fallthru
    _
  // Predicated region
  $region22: #{kalshi_cnn_forward.1} parent=0 // pred_check
    _
  $region23: #{kalshi_cnn_forward.1} parent=0 // pred_check_branch
    %29 = sbr.rel (0) target = $region25
  $region24: #{kalshi_cnn_forward.1} parent=0 // pred_region
    _
  $region25: #{kalshi_cnn_forward.1} parent=0 // pred_fallthru
    _
  // Predicated region
  $region26: #{kalshi_cnn_forward.1} parent=0 // pred_check
    _
  $region27: #{kalshi_cnn_forward.1} parent=0 // pred_check_branch
    %31 = sbr.rel (0) target = $region29
  $region28: #{kalshi_cnn_forward.1} parent=0 // pred_region
    _
  $region29: #{kalshi_cnn_forward.1} parent=0 // pred_fallthru
    _
  // Predicated region
  $region30: #{kalshi_cnn_forward.1} parent=0 // pred_check
    _
  $region31: #{kalshi_cnn_forward.1} parent=0 // pred_check_branch
    %33 = sbr.rel (0) target = $region33
  $region32: #{kalshi_cnn_forward.1} parent=0 // pred_region
    _
  $region33: #{kalshi_cnn_forward.1} parent=0 // pred_fallthru
    _
  // Predicated region
  $region34: #{kalshi_cnn_forward.1} parent=0 // pred_check
    _
  $region35: #{kalshi_cnn_forward.1} parent=0 // pred_check_branch
    %35 = sbr.rel (0) target = $region37
  $region36: #{kalshi_cnn_forward.1} parent=0 // pred_region
    _
  $region37: #{kalshi_cnn_forward.1} parent=0 // pred_fallthru
    _
  // Predicated region
  $region38: #{kalshi_cnn_forward.1} parent=0 // pred_check
    _
  $region39: #{kalshi_cnn_forward.1} parent=0 // pred_check_branch
    %37 = sbr.rel (0) target = $region41
  $region40: #{kalshi_cnn_forward.1} parent=0 // pred_region
    _
  $region41: #{kalshi_cnn_forward.1} parent=0 // pred_fallthru
    _
  // Predicated region
  $region42: #{kalshi_cnn_forward.1} parent=0 // pred_check
    _
  $region43: #{kalshi_cnn_forward.1} parent=0 // pred_check_branch
    %39 = sbr.rel (0) target = $region45
  $region44: #{kalshi_cnn_forward.1} parent=0 // pred_region
    _
  $region45: #{kalshi_cnn_forward.1} parent=0 // pred_fallthru
    _
  %v41 = vld [vmem:[%s0] sm:$0x3]
  %v44 = vunpack.c.l.s4 1966171168
  %v45 = vunpack.c.0.s8 %v44
  %v46 = vlaneseq
  %v47 = vshrl.u32 %v46, 7
  %v48 = vsub.s32 %v45, %v47
  %v49 = vrot.slane %v41, %v48
  %v50 = vcombine.high %v49, %v49
  %v52 = vunpack.c.l.s4 1966171168
  %v53 = vunpack.c.0.s8 %v52
  %v54 = vlaneseq
  %v55 = vshrl.u32 %v54, 7
  %v56 = vsub.s32 %v53, %v55
  %v57 = vrot.slane %v49, %v56
  %v59 = vunpack.c.l.s4 1966171168
  %v60 = vunpack.c.0.s8 %v59
  %v61 = vlaneseq
  %v62 = vshrl.u32 %v61, 7
  %v63 = vsub.s32 %v60, %v62
  %v64 = vrot.slane %v50, %v63
  %65 = vrot.lane.b32.xlu0 %v57, 2
  %v66 = vpop.permute.xlu0 %65
  %67 = vrot.lane.b32.xlu0 %v64, 2
  %v68 = vpop.permute.xlu0 %67
  %vm69 = vcmask 15360
  %v70 = vsel %vm69, %v66, %v68
  %vm71 = vcmask 15360
  %v74 = vsel %vm71, 0, %v66
  %75 = vrot.lane.b32.xlu0 %v57, 1
  %v76 = vpop.permute.xlu0 %75
  %77 = vrot.lane.b32.xlu0 %v64, 1
  %v78 = vpop.permute.xlu0 %77
  %vm79 = vcmask 7168
  %v80 = vsel %vm79, %v76, %v78
  %vm81 = vcmask 7168
  %v83 = vsel %vm81, 0, %v76
  %84 = vrot.lane.b32.xlu0 %v57, 127
  %v85 = vpop.permute.xlu0 %84
  %86 = vrot.lane.b32.xlu0 %v64, 127
  %v87 = vpop.permute.xlu0 %86
  %vm88 = vcmask 1039360
  %v89 = vsel %vm88, %v85, %v87
  %vm90 = vcmask 1039360
  %v92 = vsel %vm90, %v87, 0
  %93 = vrot.lane.b32.xlu0 %v57, 126
  %v94 = vpop.permute.xlu0 %93
  %95 = vrot.lane.b32.xlu0 %v64, 126
  %v96 = vpop.permute.xlu0 %95
  %vm97 = vcmask 1031168
  %v98 = vsel %vm97, %v94, %v96
  %vm99 = vcmask 1031168
  %v101 = vsel %vm99, %v96, 0
  %v103 = vrot.slane %v83, 7
  %v104 = vrot.slane %v80, 7
  %v105 = vcombine.low %v49, %v49
  %v107 = vunpack.c.l.s4 1966171168
  %v108 = vunpack.c.0.s8 %v107
  %v109 = vlaneseq
  %v110 = vshrl.u32 %v109, 7
  %v111 = vsub.s32 %v108, %v110
  %v112 = vrot.slane %v105, %v111
  %v114 = vrot.slane %v89, 5
  %v115 = vrot.slane %v92, 5
  %v117 = vrot.slane %v98, 4
  %v118 = vrot.slane %v101, 4
  %vm119 = vcmask 1040384
  %v121 = vsel %vm119, %v74, %v103
  %v124 = vsel %vm119, %v70, %v104
  %vm125 = vcmask 1041408
  %v127 = vsel %vm125, %v121, %v112
  %v129 = vsel %vm125, %v124, %v57
  %vm130 = vcmask 1042432
  %v132 = vsel %vm130, %v127, %v114
  %v134 = vsel %vm130, %v129, %v115
  %vm135 = vcmask 1043456
  %v137 = vsel %vm135, %v132, %v117
  %v139 = vsel %vm135, %v134, %v118
  %v140 = vld [vmem:[%s3] sm:$0xf]
  %v141 = vld [vmem:[%s3 + $0x4] sm:$0xf]
  %v142 = vld [vmem:[%s3 + $0x8] sm:$0xf]
  %v143 = vld [vmem:[%s3 + $0xc] sm:$0xf]
  %v144 = vld [vmem:[%s4] sm:$0xff]
  %v145 = vld [vmem:[%s4 + $0x8] sm:$0xff]
  %v146 = vld [vmem:[%s4 + $0x10] sm:$0xff]
  %v147 = vld [vmem:[%s4 + $0x18] sm:$0xff]
  %149 = vset.pattern.permute.xlu0 0
  %150 = vperm.xlu0 %149, %v144
  %v151 = vpop.permute.xlu0 %150
  %154 = vset.pattern.permute.xlu0 0
  %155 = vperm.xlu0 %154, %v145
  %v156 = vpop.permute.xlu0 %155
  %159 = vset.pattern.permute.xlu0 0
  %160 = vperm.xlu0 %159, %v146
  %v161 = vpop.permute.xlu0 %160
  %164 = vset.pattern.permute.xlu0 0
  %165 = vperm.xlu0 %164, %v147
  %v166 = vpop.permute.xlu0 %165
  %v172 = vunpack.c.l.b16 %v140
  %v173 = vunpack.c.l.b16 %v141
  %v174 = vunpack.c.l.b16 %v142
  %v175 = vunpack.c.l.b16 %v143
  %v176 = vpack.c.b16 %v173, %v172
  %v177 = vpack.c.b16 %v175, %v174
  %vm178 = vcmask 80896
  %v180 = vsel %vm178, %v176, 0
  %v183 = vsel %vm178, %v177, 0
  %vm185 = vcmask 1044480
  %v186 = vsel %vm185, %v137, 0
  %v188 = vsel %vm185, %v139, 0
  %190 = vmatprep.subr.bf16.mxu0 %v188
  %191 = vmatpush1.bf16.msra.mxu0 %v186
  %192 = vmatprep.subr.bf16.mxu0 0
  %193 = vmatpush1.bf16.msra.mxu0 0
  %194 = vmatprep.subr.bf16.mxu0 0
  %195 = vmatpush1.bf16.msra.mxu0 0
  %196 = vmatprep.subr.bf16.mxu0 0
  %197 = vmatpush1.bf16.msra.mxu0 0
  %198 = vmatprep.subr.bf16.mxu0 0
  %199 = vmatpush1.bf16.msra.mxu0 0
  %200 = vmatprep.subr.bf16.mxu0 0
  %201 = vmatpush1.bf16.msra.mxu0 0
  %202 = vmatprep.subr.bf16.mxu0 0
  %203 = vmatpush1.bf16.msra.mxu0 0
  %204 = vmatprep.subr.bf16.mxu0 0
  %205 = vmatpush1.bf16.msra.mxu0 0
  %206 = vmatprep.subr.bf16.mxu0 0
  %207 = vmatpush1.bf16.msra.mxu0 0
  %208 = vmatprep.subr.bf16.mxu0 0
  %209 = vmatpush1.bf16.msra.mxu0 0
  %210 = vmatprep.subr.bf16.mxu0 0
  %211 = vmatpush1.bf16.msra.mxu0 0
  %212 = vmatprep.subr.bf16.mxu0 0
  %213 = vmatpush1.bf16.msra.mxu0 0
  %214 = vmatprep.subr.bf16.mxu0 0
  %215 = vmatpush1.bf16.msra.mxu0 0
  %216 = vmatprep.subr.bf16.mxu0 0
  %217 = vmatpush1.bf16.msra.mxu0 0
  %218 = vmatprep.subr.bf16.mxu0 0
  %219 = vmatpush1.bf16.msra.mxu0 0
  %220 = vmatprep.subr.bf16.mxu0 0
  %221 = vmatpush1.bf16.msra.mxu0 0
  %222 = vmatprep.mubr.bf16.mxu0 0
  %223 = vmatmul.mubr.bf16.gmra.mrb[0].mxu0 %v180
  %v224 = vpop.f32.mrb[0].mxu0
  %v225 = vadd.f32 %v151, %v224
  %v226 = vpop.f32.mrb[0].mxu0
  %v227 = vadd.f32 %v151, %v226
  %v228 = vpop.f32.mrb[0].mxu0
  %v229 = vadd.f32 %v156, %v228
  %v230 = vpop.f32.mrb[0].mxu0
  %v231 = vadd.f32 %v156, %v230
  %232 = vmatprep.mubr.bf16.mxu0 0
  %233 = vmatmul.mubr.bf16.gmra.mrb[0].mxu0 %v183
  %v234 = vpop.f32.mrb[0].mxu0
  %v235 = vadd.f32 %v161, %v234
  %v236 = vpop.f32.mrb[0].mxu0
  %v237 = vadd.f32 %v161, %v236
  %v238 = vpop.f32.mrb[0].mxu0
  %v239 = vadd.f32 %v166, %v238
  %v240 = vpop.f32.mrb[0].mxu0
  %v241 = vadd.f32 %v166, %v240
  %242 = vdwg.mxu0
  %v243 = vmax.f32 %v225, 0.0
  %v244 = vmax.f32 %v227, 0.0
  %v245 = vmax.f32 %v229, 0.0
  %v246 = vmax.f32 %v231, 0.0
  %v247 = vmax.f32 %v235, 0.0
  %v248 = vmax.f32 %v237, 0.0
  %v249 = vmax.f32 %v239, 0.0
  %v250 = vmax.f32 %v241, 0.0
  %v251 = vld [vmem:[%s1] sm:$0x3]
  %v253 = vlaneseq
  %v254 = vshrl.u32 %v253, 7
  %v255 = vsub.s32 0, %v254
  %v256 = vrot.slane %v251, %v255
  %v257 = vlaneseq
  %v258 = vshrl.u32 %v257, 7
  %v259 = vsub.s32 1, %v258
  %v260 = vrot.slane %v251, %v259
  %v263 = vmul.f32 %v243, %v256
  %v264 = vmul.f32 %v244, %v260
  %v265 = vmul.f32 %v245, %v256
  %v266 = vmul.f32 %v246, %v260
  %v267 = vmul.f32 %v247, %v256
  %v268 = vmul.f32 %v248, %v260
  %v269 = vmul.f32 %v249, %v256
  %v270 = vmul.f32 %v250, %v260
  %v271 = vpack.c.bf16 %v265, %v263
  %v272 = vpack.c.bf16 %v266, %v264
  %v273 = vpack.c.bf16 %v269, %v267
  %v274 = vpack.c.bf16 %v270, %v268
  %279 = vrot.lane.b32.xlu0 %v271, 1
  %v280 = vpop.permute.xlu0 %279
  %281 = vrot.lane.b32.xlu0 %v272, 1
  %v282 = vpop.permute.xlu0 %281
  %283 = vrot.lane.b32.xlu0 %v273, 1
  %v284 = vpop.permute.xlu0 %283
  %285 = vrot.lane.b32.xlu0 %v274, 1
  %v286 = vpop.permute.xlu0 %285
  %v287 = vsel %vm79, %v280, %v282
  %v288 = vsel %vm79, %v284, %v286
  %v292 = vsel %vm81, 0, %v280
  %v295 = vsel %vm81, 0, %v284
  %297 = vrot.lane.b32.xlu0 %v271, 127
  %v298 = vpop.permute.xlu0 %297
  %299 = vrot.lane.b32.xlu0 %v272, 127
  %v300 = vpop.permute.xlu0 %299
  %301 = vrot.lane.b32.xlu0 %v273, 127
  %v302 = vpop.permute.xlu0 %301
  %303 = vrot.lane.b32.xlu0 %v274, 127
  %v304 = vpop.permute.xlu0 %303
  %v305 = vsel %vm88, %v298, %v300
  %v306 = vsel %vm88, %v302, %v304
  %v310 = vsel %vm90, %v300, 0
  %v313 = vsel %vm90, %v304, 0
  %v315 = vld [vmem:[%s5] sm:$0xf]
  %v316 = vld [vmem:[%s5 + $0x4] sm:$0xf]
  %v317 = vld [vmem:[%s5 + $0x8] sm:$0xf]
  %v318 = vld [vmem:[%s5 + $0xc] sm:$0xf]
  %v319 = vld [vmem:[%s5 + $0x10] sm:$0xf]
  %v320 = vld [vmem:[%s5 + $0x14] sm:$0xf]
  %v321 = vld [vmem:[%s5 + $0x18] sm:$0xf]
  %v322 = vld [vmem:[%s5 + $0x1c] sm:$0xf]
  %v323 = vld [vmem:[%s6] sm:$0xff]
  %v324 = vld [vmem:[%s6 + $0x8] sm:$0xff]
  %v325 = vld [vmem:[%s6 + $0x10] sm:$0xff]
  %v326 = vld [vmem:[%s6 + $0x18] sm:$0xff]
  %v327 = vld [vmem:[%s6 + $0x20] sm:$0xff]
  %v328 = vld [vmem:[%s6 + $0x28] sm:$0xff]
  %v329 = vld [vmem:[%s6 + $0x30] sm:$0xff]
  %v330 = vld [vmem:[%s6 + $0x38] sm:$0xff]
  %332 = vset.pattern.permute.xlu0 0
  %333 = vperm.xlu0 %332, %v323
  %v334 = vpop.permute.xlu0 %333
  %337 = vset.pattern.permute.xlu0 0
  %338 = vperm.xlu0 %337, %v324
  %v339 = vpop.permute.xlu0 %338
  %342 = vset.pattern.permute.xlu0 0
  %343 = vperm.xlu0 %342, %v325
  %v344 = vpop.permute.xlu0 %343
  %347 = vset.pattern.permute.xlu0 0
  %348 = vperm.xlu0 %347, %v326
  %v349 = vpop.permute.xlu0 %348
  %352 = vset.pattern.permute.xlu0 0
  %353 = vperm.xlu0 %352, %v327
  %v354 = vpop.permute.xlu0 %353
  %357 = vset.pattern.permute.xlu0 0
  %358 = vperm.xlu0 %357, %v328
  %v359 = vpop.permute.xlu0 %358
  %362 = vset.pattern.permute.xlu0 0
  %363 = vperm.xlu0 %362, %v329
  %v364 = vpop.permute.xlu0 %363
  %367 = vset.pattern.permute.xlu0 0
  %368 = vperm.xlu0 %367, %v330
  %v369 = vpop.permute.xlu0 %368
  %v379 = vunpack.c.l.b16 %v315
  %v380 = vunpack.c.l.b16 %v316
  %v381 = vunpack.c.l.b16 %v317
  %v382 = vunpack.c.l.b16 %v318
  %v383 = vunpack.c.l.b16 %v319
  %v384 = vunpack.c.l.b16 %v320
  %v385 = vunpack.c.l.b16 %v321
  %v386 = vunpack.c.l.b16 %v322
  %v387 = vpack.c.b16 %v380, %v379
  %v388 = vpack.c.b16 %v382, %v381
  %v389 = vpack.c.b16 %v384, %v383
  %v390 = vpack.c.b16 %v386, %v385
  %vm391 = vcmask 785408
  %v393 = vsel %vm391, %v387, 0
  %v396 = vsel %vm391, %v388, 0
  %v399 = vsel %vm391, %v389, 0
  %v402 = vsel %vm391, %v390, 0
  %404 = vmatprep.subr.bf16.mxu0 %v287
  %405 = vmatpush1.bf16.msra.mxu0 %v292
  %406 = vmatprep.subr.bf16.mxu0 %v288
  %407 = vmatpush1.bf16.msra.mxu0 %v295
  %408 = vmatprep.subr.bf16.mxu0 %v272
  %409 = vmatpush1.bf16.msra.mxu0 %v271
  %410 = vmatprep.subr.bf16.mxu0 %v274
  %411 = vmatpush1.bf16.msra.mxu0 %v273
  %412 = vmatprep.subr.bf16.mxu0 %v310
  %413 = vmatpush1.bf16.msra.mxu0 %v305
  %414 = vmatprep.subr.bf16.mxu0 %v313
  %415 = vmatpush1.bf16.msra.mxu0 %v306
  %416 = vmatprep.subr.bf16.mxu0 0
  %417 = vmatpush1.bf16.msra.mxu0 0
  %418 = vmatprep.subr.bf16.mxu0 0
  %419 = vmatpush1.bf16.msra.mxu0 0
  %420 = vmatprep.subr.bf16.mxu0 0
  %421 = vmatpush1.bf16.msra.mxu0 0
  %422 = vmatprep.subr.bf16.mxu0 0
  %423 = vmatpush1.bf16.msra.mxu0 0
  %424 = vmatprep.subr.bf16.mxu0 0
  %425 = vmatpush1.bf16.msra.mxu0 0
  %426 = vmatprep.subr.bf16.mxu0 0
  %427 = vmatpush1.bf16.msra.mxu0 0
  %428 = vmatprep.subr.bf16.mxu0 0
  %429 = vmatpush1.bf16.msra.mxu0 0
  %430 = vmatprep.subr.bf16.mxu0 0
  %431 = vmatpush1.bf16.msra.mxu0 0
  %432 = vmatprep.subr.bf16.mxu0 0
  %433 = vmatpush1.bf16.msra.mxu0 0
  %434 = vmatprep.subr.bf16.mxu0 0
  %435 = vmatpush1.bf16.msra.mxu0 0
  %436 = vmatprep.mubr.bf16.mxu0 0
  %437 = vmatmul.mubr.bf16.gmra.mrb[0].mxu0 %v393
  %v438 = vpop.f32.mrb[0].mxu0
  %v439 = vadd.f32 %v334, %v438
  %v440 = vpop.f32.mrb[0].mxu0
  %v441 = vadd.f32 %v334, %v440
  %v442 = vpop.f32.mrb[0].mxu0
  %v443 = vadd.f32 %v339, %v442
  %v444 = vpop.f32.mrb[0].mxu0
  %v445 = vadd.f32 %v339, %v444
  %446 = vmatprep.mubr.bf16.mxu0 0
  %447 = vmatmul.mubr.bf16.gmra.mrb[0].mxu0 %v396
  %v448 = vpop.f32.mrb[0].mxu0
  %v449 = vadd.f32 %v344, %v448
  %v450 = vpop.f32.mrb[0].mxu0
  %v451 = vadd.f32 %v344, %v450
  %v452 = vpop.f32.mrb[0].mxu0
  %v453 = vadd.f32 %v349, %v452
  %v454 = vpop.f32.mrb[0].mxu0
  %v455 = vadd.f32 %v349, %v454
  %456 = vmatprep.mubr.bf16.mxu0 0
  %457 = vmatmul.mubr.bf16.gmra.mrb[0].mxu0 %v399
  %v458 = vpop.f32.mrb[0].mxu0
  %v459 = vadd.f32 %v354, %v458
  %v460 = vpop.f32.mrb[0].mxu0
  %v461 = vadd.f32 %v354, %v460
  %v462 = vpop.f32.mrb[0].mxu0
  %v463 = vadd.f32 %v359, %v462
  %v464 = vpop.f32.mrb[0].mxu0
  %v465 = vadd.f32 %v359, %v464
  %466 = vmatprep.mubr.bf16.mxu0 0
  %467 = vmatmul.mubr.bf16.gmra.mrb[0].mxu0 %v402
  %v468 = vpop.f32.mrb[0].mxu0
  %v469 = vadd.f32 %v364, %v468
  %v470 = vpop.f32.mrb[0].mxu0
  %v471 = vadd.f32 %v364, %v470
  %v472 = vpop.f32.mrb[0].mxu0
  %v473 = vadd.f32 %v369, %v472
  %v474 = vpop.f32.mrb[0].mxu0
  %v475 = vadd.f32 %v369, %v474
  %476 = vdwg.mxu0
  %v477 = vmax.f32 %v439, 0.0
  %v478 = vmax.f32 %v441, 0.0
  %v479 = vmax.f32 %v443, 0.0
  %v480 = vmax.f32 %v445, 0.0
  %v481 = vmax.f32 %v449, 0.0
  %v482 = vmax.f32 %v451, 0.0
  %v483 = vmax.f32 %v453, 0.0
  %v484 = vmax.f32 %v455, 0.0
  %v485 = vmax.f32 %v459, 0.0
  %v486 = vmax.f32 %v461, 0.0
  %v487 = vmax.f32 %v463, 0.0
  %v488 = vmax.f32 %v465, 0.0
  %v489 = vmax.f32 %v469, 0.0
  %v490 = vmax.f32 %v471, 0.0
  %v491 = vmax.f32 %v473, 0.0
  %v492 = vmax.f32 %v475, 0.0
  %v493 = vpack.c.bf16 %v479, %v477
  %v494 = vpack.c.bf16 %v480, %v478
  %v495 = vpack.c.bf16 %v483, %v481
  %v496 = vpack.c.bf16 %v484, %v482
  %v497 = vpack.c.bf16 %v487, %v485
  %v498 = vpack.c.bf16 %v488, %v486
  %v499 = vpack.c.bf16 %v491, %v489
  %v500 = vpack.c.bf16 %v492, %v490
  %v501 = vld [vmem:[%s2] sm:$0xf]
  %v502 = vld [vmem:[%s2 + $0x4] sm:$0xf]
  %v503 = vld [vmem:[%s2 + $0x8] sm:$0xf]
  %v504 = vld [vmem:[%s2 + $0xc] sm:$0xf]
  %v505 = vld [vmem:[%s2 + $0x10] sm:$0xf]
  %v506 = vld [vmem:[%s2 + $0x14] sm:$0xf]
  %v507 = vld [vmem:[%s2 + $0x18] sm:$0xf]
  %v508 = vld [vmem:[%s2 + $0x1c] sm:$0xf]
  %v509 = vld [vmem:[%s2 + $0x20] sm:$0xf]
  %v510 = vld [vmem:[%s2 + $0x24] sm:$0xf]
  %v511 = vld [vmem:[%s2 + $0x28] sm:$0xf]
  %v512 = vld [vmem:[%s2 + $0x2c] sm:$0xf]
  %v513 = vld [vmem:[%s2 + $0x30] sm:$0xf]
  %v514 = vld [vmem:[%s2 + $0x34] sm:$0xf]
  %v515 = vld [vmem:[%s2 + $0x38] sm:$0xf]
  %v516 = vld [vmem:[%s2 + $0x3c] sm:$0xf]
  %v517 = vld [vmem:[%s2 + $0x40] sm:$0xf]
  %v518 = vld [vmem:[%s2 + $0x44] sm:$0xf]
  %v519 = vld [vmem:[%s2 + $0x48] sm:$0xf]
  %v520 = vld [vmem:[%s2 + $0x4c] sm:$0xf]
  %v521 = vld [vmem:[%s2 + $0x50] sm:$0xf]
  %v522 = vld [vmem:[%s2 + $0x54] sm:$0xf]
  %v523 = vld [vmem:[%s2 + $0x58] sm:$0xf]
  %v524 = vld [vmem:[%s2 + $0x5c] sm:$0xf]
  %v525 = vld [vmem:[%s2 + $0x60] sm:$0xf]
  %v526 = vld [vmem:[%s2 + $0x64] sm:$0xf]
  %v527 = vld [vmem:[%s2 + $0x68] sm:$0xf]
  %v528 = vld [vmem:[%s2 + $0x6c] sm:$0xf]
  %v529 = vld [vmem:[%s2 + $0x70] sm:$0xf]
  %v530 = vld [vmem:[%s2 + $0x74] sm:$0xf]
  %v531 = vld [vmem:[%s2 + $0x78] sm:$0xf]
  %v532 = vld [vmem:[%s2 + $0x7c] sm:$0xf]
  %v565 = vunpack.c.l.b16 %v501
  %v566 = vunpack.c.l.b16 %v502
  %v567 = vunpack.c.l.b16 %v503
  %v568 = vunpack.c.l.b16 %v504
  %v569 = vunpack.c.l.b16 %v505
  %v570 = vunpack.c.l.b16 %v506
  %v571 = vunpack.c.l.b16 %v507
  %v572 = vunpack.c.l.b16 %v508
  %v573 = vunpack.c.l.b16 %v509
  %v574 = vunpack.c.l.b16 %v510
  %v575 = vunpack.c.l.b16 %v511
  %v576 = vunpack.c.l.b16 %v512
  %v577 = vunpack.c.l.b16 %v513
  %v578 = vunpack.c.l.b16 %v514
  %v579 = vunpack.c.l.b16 %v515
  %v580 = vunpack.c.l.b16 %v516
  %v581 = vunpack.c.l.b16 %v517
  %v582 = vunpack.c.l.b16 %v518
  %v583 = vunpack.c.l.b16 %v519
  %v584 = vunpack.c.l.b16 %v520
  %v585 = vunpack.c.l.b16 %v521
  %v586 = vunpack.c.l.b16 %v522
  %v587 = vunpack.c.l.b16 %v523
  %v588 = vunpack.c.l.b16 %v524
  %v589 = vunpack.c.l.b16 %v525
  %v590 = vunpack.c.l.b16 %v526
  %v591 = vunpack.c.l.b16 %v527
  %v592 = vunpack.c.l.b16 %v528
  %v593 = vunpack.c.l.b16 %v529
  %v594 = vunpack.c.l.b16 %v530
  %v595 = vunpack.c.l.b16 %v531
  %v596 = vunpack.c.l.b16 %v532
  %v597 = vpack.c.b16 %v566, %v565
  %v598 = vpack.c.b16 %v568, %v567
  %v599 = vpack.c.b16 %v570, %v569
  %v600 = vpack.c.b16 %v572, %v571
  %v601 = vpack.c.b16 %v574, %v573
  %v602 = vpack.c.b16 %v576, %v575
  %v603 = vpack.c.b16 %v578, %v577
  %v604 = vpack.c.b16 %v580, %v579
  %v605 = vpack.c.b16 %v582, %v581
  %v606 = vpack.c.b16 %v584, %v583
  %v607 = vpack.c.b16 %v586, %v585
  %v608 = vpack.c.b16 %v588, %v587
  %v609 = vpack.c.b16 %v590, %v589
  %v610 = vpack.c.b16 %v592, %v591
  %v611 = vpack.c.b16 %v594, %v593
  %v612 = vpack.c.b16 %v596, %v595
  %629 = vmatprep.subr.bf16.mxu0 0
  %630 = vmatpush1.bf16.msra.mxu0 %v597
  %631 = vmatprep.subr.bf16.mxu0 0
  %632 = vmatpush1.bf16.msra.mxu0 %v598
  %633 = vmatprep.subr.bf16.mxu0 0
  %634 = vmatpush1.bf16.msra.mxu0 %v599
  %635 = vmatprep.subr.bf16.mxu0 0
  %636 = vmatpush1.bf16.msra.mxu0 %v600
  %637 = vmatprep.subr.bf16.mxu0 0
  %638 = vmatpush1.bf16.msra.mxu0 %v601
  %639 = vmatprep.subr.bf16.mxu0 0
  %640 = vmatpush1.bf16.msra.mxu0 %v602
  %641 = vmatprep.subr.bf16.mxu0 0
  %642 = vmatpush1.bf16.msra.mxu0 %v603
  %643 = vmatprep.subr.bf16.mxu0 0
  %644 = vmatpush1.bf16.msra.mxu0 %v604
  %645 = vmatprep.subr.bf16.mxu0 0
  %646 = vmatpush1.bf16.msra.mxu0 %v605
  %647 = vmatprep.subr.bf16.mxu0 0
  %648 = vmatpush1.bf16.msra.mxu0 %v606
  %649 = vmatprep.subr.bf16.mxu0 0
  %650 = vmatpush1.bf16.msra.mxu0 %v607
  %651 = vmatprep.subr.bf16.mxu0 0
  %652 = vmatpush1.bf16.msra.mxu0 %v608
  %653 = vmatprep.subr.bf16.mxu0 0
  %654 = vmatpush1.bf16.msra.mxu0 %v609
  %655 = vmatprep.subr.bf16.mxu0 0
  %656 = vmatpush1.bf16.msra.mxu0 %v610
  %657 = vmatprep.subr.bf16.mxu0 0
  %658 = vmatpush1.bf16.msra.mxu0 %v611
  %659 = vmatprep.subr.bf16.mxu0 0
  %660 = vmatpush1.bf16.msra.mxu0 %v612
  %661 = vmatprep.mubr.bf16.mxu0 %v494
  %662 = vmatmul.mubr.bf16.gmra.mrb[0].mxu0 %v493
  %v663 = vpop.f32.mrb[0].mxu0
  %v664 = vadd.f32 0.0, %v663
  %v665 = vpop.f32.mrb[0].mxu0
  %v666 = vpop.f32.mrb[0].mxu0
  %v667 = vadd.f32 0.0, %v666
  %v668 = vpop.f32.mrb[0].mxu0
  %669 = vmatprep.mubr.bf16.mxu0 %v496
  %670 = vmatmul.mubr.bf16.gmra.mrb[0].mxu0 %v495
  %v671 = vpop.f32.mrb[0].mxu0
  %v672 = vadd.f32 0.0, %v671
  %v673 = vpop.f32.mrb[0].mxu0
  %v674 = vpop.f32.mrb[0].mxu0
  %v675 = vadd.f32 0.0, %v674
  %v676 = vpop.f32.mrb[0].mxu0
  %677 = vmatprep.mubr.bf16.mxu0 %v498
  %678 = vmatmul.mubr.bf16.gmra.mrb[0].mxu0 %v497
  %v679 = vpop.f32.mrb[0].mxu0
  %v680 = vadd.f32 0.0, %v679
  %v681 = vpop.f32.mrb[0].mxu0
  %v682 = vpop.f32.mrb[0].mxu0
  %v683 = vadd.f32 0.0, %v682
  %v684 = vpop.f32.mrb[0].mxu0
  %685 = vmatprep.mubr.bf16.mxu0 %v500
  %686 = vmatmul.mubr.bf16.gmra.mrb[0].mxu0 %v499
  %v687 = vpop.f32.mrb[0].mxu0
  %v688 = vadd.f32 0.0, %v687
  %v689 = vpop.f32.mrb[0].mxu0
  %v690 = vpop.f32.mrb[0].mxu0
  %v691 = vadd.f32 0.0, %v690
  %v692 = vpop.f32.mrb[0].mxu0
  %693 = vdwg.mxu0
  %v694 = vmul.f32 %v664, 0.0625
  %v695 = vmul.f32 %v667, 0.0625
  %v696 = vmul.f32 %v672, 0.0625
  %v697 = vmul.f32 %v675, 0.0625
  %v698 = vmul.f32 %v680, 0.0625
  %v699 = vmul.f32 %v683, 0.0625
  %v700 = vmul.f32 %v688, 0.0625
  %v701 = vmul.f32 %v691, 0.0625
  %v702 = vld [vmem:[%s7] sm:$0xf]
  %v703 = vld [vmem:[%s7 + $0x4] sm:$0xf]
  %v704 = vld [vmem:[%s7 + $0x8] sm:$0xf]
  %v705 = vld [vmem:[%s7 + $0xc] sm:$0xf]
  %v706 = vld [vmem:[%s7 + $0x10] sm:$0xf]
  %v707 = vld [vmem:[%s7 + $0x14] sm:$0xf]
  %v708 = vld [vmem:[%s7 + $0x18] sm:$0xf]
  %v709 = vld [vmem:[%s7 + $0x1c] sm:$0xf]
  %v710 = vpack.c.bf16 %v695, %v694
  %v711 = vpack.c.bf16 %v697, %v696
  %v712 = vpack.c.bf16 %v699, %v698
  %v713 = vpack.c.bf16 %v701, %v700
  %v714 = vld [vmem:[%s8] sm:$0xff]
  %v715 = vld [vmem:[%s8 + $0x8] sm:$0xff]
  %v716 = vld [vmem:[%s8 + $0x10] sm:$0xff]
  %v717 = vld [vmem:[%s8 + $0x18] sm:$0xff]
  %v718 = vld [vmem:[%s8 + $0x20] sm:$0xff]
  %v719 = vld [vmem:[%s8 + $0x28] sm:$0xff]
  %v720 = vld [vmem:[%s8 + $0x30] sm:$0xff]
  %v721 = vld [vmem:[%s8 + $0x38] sm:$0xff]
  %723 = vset.pattern.permute.xlu0 0
  %724 = vperm.xlu0 %723, %v714
  %v725 = vpop.permute.xlu0 %724
  %728 = vset.pattern.permute.xlu0 0
  %729 = vperm.xlu0 %728, %v715
  %v730 = vpop.permute.xlu0 %729
  %733 = vset.pattern.permute.xlu0 0
  %734 = vperm.xlu0 %733, %v716
  %v735 = vpop.permute.xlu0 %734
  %738 = vset.pattern.permute.xlu0 0
  %739 = vperm.xlu0 %738, %v717
  %v740 = vpop.permute.xlu0 %739
  %743 = vset.pattern.permute.xlu0 0
  %744 = vperm.xlu0 %743, %v718
  %v745 = vpop.permute.xlu0 %744
  %748 = vset.pattern.permute.xlu0 0
  %749 = vperm.xlu0 %748, %v719
  %v750 = vpop.permute.xlu0 %749
  %753 = vset.pattern.permute.xlu0 0
  %754 = vperm.xlu0 %753, %v720
  %v755 = vpop.permute.xlu0 %754
  %758 = vset.pattern.permute.xlu0 0
  %759 = vperm.xlu0 %758, %v721
  %v760 = vpop.permute.xlu0 %759
  %v770 = vunpack.c.l.b16 %v702
  %v771 = vunpack.c.l.b16 %v703
  %v772 = vunpack.c.l.b16 %v704
  %v773 = vunpack.c.l.b16 %v705
  %v774 = vunpack.c.l.b16 %v706
  %v775 = vunpack.c.l.b16 %v707
  %v776 = vunpack.c.l.b16 %v708
  %v777 = vunpack.c.l.b16 %v709
  %v778 = vpack.c.b16 %v771, %v770
  %v779 = vpack.c.b16 %v773, %v772
  %v780 = vpack.c.b16 %v775, %v774
  %v781 = vpack.c.b16 %v777, %v776
  %vm782 = vcmask 523264
  %v784 = vsel %vm782, %v778, 0
  %v787 = vsel %vm782, %v779, 0
  %v790 = vsel %vm782, %v780, 0
  %v793 = vsel %vm782, %v781, 0
  %795 = vmatprep.subr.bf16.mxu0 0
  %796 = vmatpush1.bf16.msra.mxu0 %v710
  %797 = vmatprep.subr.bf16.mxu0 0
  %798 = vmatpush1.bf16.msra.mxu0 %v711
  %799 = vmatprep.subr.bf16.mxu0 0
  %800 = vmatpush1.bf16.msra.mxu0 %v712
  %801 = vmatprep.subr.bf16.mxu0 0
  %802 = vmatpush1.bf16.msra.mxu0 %v713
  %803 = vmatprep.subr.bf16.mxu0 0
  %804 = vmatpush1.bf16.msra.mxu0 0
  %805 = vmatprep.subr.bf16.mxu0 0
  %806 = vmatpush1.bf16.msra.mxu0 0
  %807 = vmatprep.subr.bf16.mxu0 0
  %808 = vmatpush1.bf16.msra.mxu0 0
  %809 = vmatprep.subr.bf16.mxu0 0
  %810 = vmatpush1.bf16.msra.mxu0 0
  %811 = vmatprep.subr.bf16.mxu0 0
  %812 = vmatpush1.bf16.msra.mxu0 0
  %813 = vmatprep.subr.bf16.mxu0 0
  %814 = vmatpush1.bf16.msra.mxu0 0
  %815 = vmatprep.subr.bf16.mxu0 0
  %816 = vmatpush1.bf16.msra.mxu0 0
  %817 = vmatprep.subr.bf16.mxu0 0
  %818 = vmatpush1.bf16.msra.mxu0 0
  %819 = vmatprep.subr.bf16.mxu0 0
  %820 = vmatpush1.bf16.msra.mxu0 0
  %821 = vmatprep.subr.bf16.mxu0 0
  %822 = vmatpush1.bf16.msra.mxu0 0
  %823 = vmatprep.subr.bf16.mxu0 0
  %824 = vmatpush1.bf16.msra.mxu0 0
  %825 = vmatprep.subr.bf16.mxu0 0
  %826 = vmatpush1.bf16.msra.mxu0 0
  %827 = vmatprep.mubr.bf16.mxu0 0
  %828 = vmatmul.mubr.bf16.gmra.mrb[0].mxu0 %v784
  %v829 = vpop.f32.mrb[0].mxu0
  %v830 = vadd.f32 %v725, %v829
  %v831 = vpop.f32.mrb[0].mxu0
  %v832 = vpop.f32.mrb[0].mxu0
  %v833 = vadd.f32 %v730, %v832
  %v834 = vpop.f32.mrb[0].mxu0
  %835 = vmatprep.mubr.bf16.mxu0 0
  %836 = vmatmul.mubr.bf16.gmra.mrb[0].mxu0 %v787
  %v837 = vpop.f32.mrb[0].mxu0
  %v838 = vadd.f32 %v735, %v837
  %v839 = vpop.f32.mrb[0].mxu0
  %v840 = vpop.f32.mrb[0].mxu0
  %v841 = vadd.f32 %v740, %v840
  %v842 = vpop.f32.mrb[0].mxu0
  %843 = vmatprep.mubr.bf16.mxu0 0
  %844 = vmatmul.mubr.bf16.gmra.mrb[0].mxu0 %v790
  %v845 = vpop.f32.mrb[0].mxu0
  %v846 = vadd.f32 %v745, %v845
  %v847 = vpop.f32.mrb[0].mxu0
  %v848 = vpop.f32.mrb[0].mxu0
  %v849 = vadd.f32 %v750, %v848
  %v850 = vpop.f32.mrb[0].mxu0
  %851 = vmatprep.mubr.bf16.mxu0 0
  %852 = vmatmul.mubr.bf16.gmra.mrb[0].mxu0 %v793
  %v853 = vpop.f32.mrb[0].mxu0
  %v854 = vadd.f32 %v755, %v853
  %v855 = vpop.f32.mrb[0].mxu0
  %v856 = vpop.f32.mrb[0].mxu0
  %v857 = vadd.f32 %v760, %v856
  %v858 = vpop.f32.mrb[0].mxu0
  %859 = vdwg.mxu0
  %v860 = vmax.f32 %v830, 0.0
  %v861 = vmax.f32 %v833, 0.0
  %v862 = vmax.f32 %v838, 0.0
  %v863 = vmax.f32 %v841, 0.0
  %v864 = vmax.f32 %v846, 0.0
  %v865 = vmax.f32 %v849, 0.0
  %v866 = vmax.f32 %v854, 0.0
  %v867 = vmax.f32 %v857, 0.0
  %v868 = vld [vmem:[%s9] sm:$0xff]
  %v869 = vld [vmem:[%s9 + $0x8] sm:$0xff]
  %v870 = vld [vmem:[%s9 + $0x10] sm:$0xff]
  %v871 = vld [vmem:[%s9 + $0x18] sm:$0xff]
  %v872 = vld [vmem:[%s9 + $0x20] sm:$0xff]
  %v873 = vld [vmem:[%s9 + $0x28] sm:$0xff]
  %v874 = vld [vmem:[%s9 + $0x30] sm:$0xff]
  %v875 = vld [vmem:[%s9 + $0x38] sm:$0xff]
  %877 = vset.pattern.permute.xlu0 0
  %878 = vperm.xlu0 %877, %v868
  %v879 = vpop.permute.xlu0 %878
  %882 = vset.pattern.permute.xlu0 0
  %883 = vperm.xlu0 %882, %v869
  %v884 = vpop.permute.xlu0 %883
  %887 = vset.pattern.permute.xlu0 0
  %888 = vperm.xlu0 %887, %v870
  %v889 = vpop.permute.xlu0 %888
  %892 = vset.pattern.permute.xlu0 0
  %893 = vperm.xlu0 %892, %v871
  %v894 = vpop.permute.xlu0 %893
  %897 = vset.pattern.permute.xlu0 0
  %898 = vperm.xlu0 %897, %v872
  %v899 = vpop.permute.xlu0 %898
  %902 = vset.pattern.permute.xlu0 0
  %903 = vperm.xlu0 %902, %v873
  %v904 = vpop.permute.xlu0 %903
  %907 = vset.pattern.permute.xlu0 0
  %908 = vperm.xlu0 %907, %v874
  %v909 = vpop.permute.xlu0 %908
  %912 = vset.pattern.permute.xlu0 0
  %913 = vperm.xlu0 %912, %v875
  %v914 = vpop.permute.xlu0 %913
  %v916 = vmul.f32 %v860, %v879
  %v917 = vmul.f32 %v861, %v884
  %v918 = vmul.f32 %v862, %v889
  %v919 = vmul.f32 %v863, %v894
  %v920 = vmul.f32 %v864, %v899
  %v921 = vmul.f32 %v865, %v904
  %v922 = vmul.f32 %v866, %v909
  %v923 = vmul.f32 %v867, %v914
  %vm924 = vcmask 64512
  %v925 = vsel %vm924, %v916, 0.0
  %v926 = vsel %vm924, %v917, 0.0
  %v927 = vadd.f32 %v925, %v926
  %v928 = vsel %vm924, %v918, 0.0
  %v929 = vadd.f32 %v927, %v928
  %v930 = vsel %vm924, %v919, 0.0
  %v931 = vadd.f32 %v929, %v930
  %v932 = vsel %vm924, %v920, 0.0
  %v933 = vadd.f32 %v931, %v932
  %v934 = vsel %vm924, %v921, 0.0
  %v935 = vadd.f32 %v933, %v934
  %v936 = vsel %vm924, %v922, 0.0
  %v937 = vadd.f32 %v935, %v936
  %v938 = vsel %vm924, %v923, 0.0
  %v939 = vadd.f32 %v937, %v938
  %v940 = vrot.slane %v939, 4
  %v941 = vadd.f32 %v939, %v940
  %v942 = vrot.slane %v941, 2
  %v943 = vadd.f32 %v941, %v942
  %v944 = vrot.slane %v943, 1
  %v945 = vadd.f32 %v943, %v944
  %v946 = vld [vmem:[#allocation2] sm:$0x1]
  %948 = vset.pattern.permute.xlu0 0
  %949 = vperm.xlu0 %948, %v946
  %v950 = vpop.permute.xlu0 %949
  %v952 = vlaneseq
  %v953 = vshrl.u32 %v952, 7
  %v954 = vsub.s32 0, %v953
  %v955 = vrot.slane %v950, %v954
  %v956 = vadd.f32 %v945, %v955
  %vm957 = vcmask 57344
  %958 = vst.msk [vmem:[%s11] sm:$0x1] %vm957, %v956
  // Predicated region
  $region46: #{kalshi_cnn_forward.1} parent=0 // pred_check
    _
  $region47: #{kalshi_cnn_forward.1} parent=0 // pred_check_branch
    %960 = sbr.rel (0) target = $region49
  $region48: #{kalshi_cnn_forward.1} parent=0 // pred_region
    _
  $region49: #{kalshi_cnn_forward.1} parent=0 // pred_fallthru
    _
  // Predicated region
  $region50: #{kalshi_cnn_forward.1} parent=0 // pred_check
    _
  $region51: #{kalshi_cnn_forward.1} parent=0 // pred_check_branch
    %962 = sbr.rel (0) target = $region53
  $region52: #{kalshi_cnn_forward.1} parent=0 // pred_region
    _
  $region53: #{kalshi_cnn_forward.1} parent=0 // pred_fallthru
    _

</llo_original>
